<compile_context>
chip_gen: v7x
topology: tpu7x:2x2x1
jax: 0.10.0
libtpu: 0.0.40
codegen_flags: <defaults>
</compile_context>

<pallas_src>
import functools

import jax
import jax.numpy as jnp
from jax.experimental import pallas as pl
from jax.experimental.pallas import tpu as pltpu

_IGNORE_INDEX = -100
_MIB = 1024 * 1024


def _round_up(x, m):
    return (x + m - 1) // m * m


def _vmem_budget(itemsize):
    """Return (logits block budget in ELEMENTS, vmem_limit_bytes) per TPU gen."""
    try:
        cap = getattr(pltpu.get_tpu_info(), "vmem_capacity_bytes", None)
    except Exception:  # no TPU info available at trace time
        cap = None
    if cap is not None and cap >= 100 * _MIB:
        # v5e / v6e: 128 MiB physical VMEM -> big blocks, fewer grid steps.
        elems = (4 * _MIB) if itemsize <= 2 else (2 * _MIB)
        return elems, 100 * _MIB
    if cap is not None:
        # v7x: 64 MiB per TensorCore -> modest blocks, headroom for the
        # compiler-materialized f32 full-tile temporaries + 2nd core's state.
        elems = (1 * _MIB) if itemsize <= 2 else (768 * 1024)
        return elems, 40 * _MIB
    # Unknown backend: conservative defaults that fit every generation.
    return 1 * _MIB, 48 * _MIB


def _choose_tiles(n_rows, vocab, budget):
    """Pick (TM, TV) row/vocab tile sizes under the per-block element budget."""
    rows_cap = min(512, _round_up(max(n_rows, 1), 8))
    if n_rows > 8:
        # Megacore (v7x): make sure the "parallel" row axis has >= 2 blocks.
        rows_cap = min(rows_cap, _round_up((n_rows + 1) // 2, 8))

    # Case 1: the full vocab fits in one block with a decent row tile.
    tm_full = (budget // max(vocab, 1)) // 8 * 8
    if tm_full >= 64 or tm_full >= rows_cap:
        return max(8, min(rows_cap, tm_full)), vocab

    # Case 2: large vocab -> tile it. Bias toward big TV (long contiguous HBM
    # bursts, fewer online-softmax rescale passes) and TM <= 128.
    tm = max(8, min(rows_cap, 128))
    tv = max(128, (budget // tm) // 128 * 128)
    tv = min(tv, _round_up(vocab, 128))

    # Prefer a 128-multiple TV that divides V (removes the tail-mask block
    # entirely), but only if it is not much smaller than the budgeted TV.
    best_div = 0
    for cand in range(tv - (tv % 128), 0, -128):
        if vocab % cand == 0:
            best_div = cand
            break
    if best_div >= (3 * tv) // 4:
        tv = best_div
    return tm, int(tv)


def _ce_kernel(logits_ref, labels_ref, loss_ref, m_sc, l_sc, p_sc, *, vocab_size):
    j = pl.program_id(1)                 # vocab-block index (innermost, "arbitrary")
    nj = pl.num_programs(1)

    @pl.when(j == 0)
    def _():
        m_sc[...] = jnp.full_like(m_sc, -jnp.inf)   # running max
        l_sc[...] = jnp.zeros_like(l_sc)            # running exp-sum
        p_sc[...] = jnp.zeros_like(p_sc)            # picked label logit

    labels = labels_ref[...]                        # (TM, 1) int32
    tv = logits_ref.shape[-1]

    # Block-LOCAL column index: the "+ j*TV" shift is applied to the (TM,1)
    # labels instead of the full (TM,TV) tile -> one fewer full-tile VPU pass.
    col = jax.lax.broadcasted_iota(jnp.int32, logits_ref.shape, 1)
    local_label = labels - j * tv                   # (TM, 1)

    def update(x):
        # Label pick: the label column lives in exactly one vocab block.
        # (ignore_index / padded rows never match -> contribute 0.)
        p_sc[...] += jnp.sum(
            jnp.where(col == local_label, x, 0.0), axis=-1, keepdims=True
        )
        # Online logsumexp.
        m_new = jnp.maximum(m_sc[...], jnp.max(x, axis=-1, keepdims=True))
        alpha = jnp.exp(m_sc[...] - m_new)
        l_sc[...] = alpha * l_sc[...] + jnp.sum(
            jnp.exp(x - m_new), axis=-1, keepdims=True
        )
        m_sc[...] = m_new

    x = logits_ref[...].astype(jnp.float32)         # (TM, TV)

    if vocab_size % tv != 0:
        # Last vocab block overhangs the array: mask out-of-range columns with
        # -inf, but ONLY on that block; every other block takes the mask-free path.
        is_tail = j == nj - 1

        @pl.when(is_tail)
        def _():
            update(jnp.where(col < vocab_size - j * tv, x, -jnp.inf))

        @pl.when(j < nj - 1)
        def _():
            update(x)
    else:
        update(x)

    @pl.when(j == nj - 1)
    def _():
        lse = m_sc[...] + jnp.log(l_sc[...])
        valid = labels != _IGNORE_INDEX
        # Invalid (ignored / padded / overhang) rows write exactly 0.
        loss_ref[...] = jnp.where(valid, lse - p_sc[...], 0.0)


def gpt_lm_loss(logits, labels, *, max_block_elems=None):
    """logits: (B, S, V) float (f32 or bf16); labels: (B, S) int. Scalar mean CE."""
    B, S, V = logits.shape
    itemsize = jnp.dtype(logits.dtype).itemsize
    if max_block_elems is None:
        budget, vmem_limit = _vmem_budget(itemsize)
    else:
        budget, vmem_limit = max_block_elems, 48 * _MIB

    # Free, copy-less reshape of the contiguous logits; the shift is on labels.
    flat_logits = logits.reshape(B * S, V)
    lab = labels.astype(jnp.int32)
    shifted = jnp.concatenate(
        [lab[:, 1:], jnp.full((B, 1), _IGNORE_INDEX, jnp.int32)], axis=1
    ).reshape(B * S)
    n_valid = jnp.sum((shifted != _IGNORE_INDEX).astype(jnp.float32))

    n_rows = B * S
    TM, TV = _choose_tiles(n_rows, V, budget)
    grid_r = pl.cdiv(n_rows, TM)
    grid_v = pl.cdiv(V, TV)

    # Pad only the (tiny) labels so overhang rows are cleanly ignored; the
    # logits are never copied/padded (boundary blocks are masked in-kernel).
    pad_rows = grid_r * TM - n_rows
    if pad_rows:
        shifted = jnp.pad(shifted, (0, pad_rows), constant_values=_IGNORE_INDEX)
    labels2d = shifted.reshape(grid_r * TM, 1)

    kernel = functools.partial(_ce_kernel, vocab_size=V)
    cost = pl.CostEstimate(
        flops=6 * n_rows * V,
        transcendentals=n_rows * V,
        bytes_accessed=n_rows * V * itemsize + n_rows * 8,
    )

    row_loss = pl.pallas_call(
        kernel,
        out_shape=jax.ShapeDtypeStruct((grid_r * TM, 1), jnp.float32),
        grid_spec=pltpu.PrefetchScalarGridSpec(
            num_scalar_prefetch=0,
            grid=(grid_r, grid_v),
            in_specs=[
                pl.BlockSpec((TM, TV), lambda i, j: (i, j)),
                pl.BlockSpec((TM, 1), lambda i, j: (i, 0)),
            ],
            out_specs=pl.BlockSpec((TM, 1), lambda i, j: (i, 0)),
            scratch_shapes=[
                pltpu.VMEM((TM, 1), jnp.float32),  # running max
                pltpu.VMEM((TM, 1), jnp.float32),  # running exp-sum
                pltpu.VMEM((TM, 1), jnp.float32),  # picked label logit
            ],
        ),
        compiler_params=pltpu.CompilerParams(
            dimension_semantics=("parallel", "arbitrary"),
            vmem_limit_bytes=vmem_limit,
        ),
        cost_estimate=cost,
    )(flat_logits, labels2d)

    # TODO(synk): optional bf16 exp/max path on v6e/v7x (EUP/VPU-bound) once
    # loss tolerance at bf16 is validated; keeping f32 math for exactness.
    return jnp.sum(row_loss) / n_valid


def _reference_loss(logits, labels):
    B, S, V = logits.shape
    sl = logits[:, :-1, :].reshape(-1, V).astype(jnp.float32)
    tl = labels[:, 1:].reshape(-1)
    valid = tl != _IGNORE_INDEX
    lse = jax.nn.logsumexp(sl, axis=-1)
    safe = jnp.where(valid, tl, 0)
    picked = jnp.take_along_axis(sl, safe[:, None], axis=-1)[:, 0]
    return jnp.sum(jnp.where(valid, lse - picked, 0.0)) / jnp.sum(valid)


if __name__ == "__main__":
    key = jax.random.PRNGKey(0)
    k1, k2, k3, k4, k5, k6 = jax.random.split(key, 6)

    # Case 1: small vocab (single vocab block) + ignore_index path.
    B, S, V = 2, 9, 128
    logits = jax.random.normal(k1, (B, S, V), dtype=jnp.float32)
    labels = jax.random.randint(k2, (B, S), 0, V, dtype=jnp.int32)
    labels = labels.at[0, 3].set(_IGNORE_INDEX).at[1, 7].set(_IGNORE_INDEX)
    loss = gpt_lm_loss(logits, labels)
    jax.block_until_ready(loss)
    ref = _reference_loss(logits, labels)
    assert jnp.allclose(loss, ref, atol=1e-5, rtol=1e-5), (loss, ref)

    # Case 2: vocab not a multiple of 128 -> forced vocab tiling, exercises the
    # online logsumexp, the gated tail-mask block and row-overhang masking.
    B2, S2, V2 = 2, 9, 200
    logits2 = jax.random.normal(k3, (B2, S2, V2), dtype=jnp.float32)
    labels2 = jax.random.randint(k4, (B2, S2), 0, V2, dtype=jnp.int32)
    labels2 = labels2.at[1, 2].set(_IGNORE_INDEX)
    loss2 = gpt_lm_loss(logits2, labels2, max_block_elems=2048)  # forces TV=128 < V2
    jax.block_until_ready(loss2)
    ref2 = _reference_loss(logits2, labels2)
    assert jnp.allclose(loss2, ref2, atol=1e-5, rtol=1e-5), (loss2, ref2)

    # Case 3: vocab a multiple of the tile -> multi-block online logsumexp with
    # NO tail masking (divisor-TV path).
    B3, S3, V3 = 2, 9, 256
    logits3 = jax.random.normal(k5, (B3, S3, V3), dtype=jnp.float32)
    labels3 = jax.random.randint(k6, (B3, S3), 0, V3, dtype=jnp.int32)
    loss3 = gpt_lm_loss(logits3, labels3, max_block_elems=2048)  # TV=128 divides 256
    jax.block_until_ready(loss3)
    ref3 = _reference_loss(logits3, labels3)
    assert jnp.allclose(loss3, ref3, atol=1e-5, rtol=1e-5), (loss3, ref3)

    print("KERNEL_OK")
</pallas_src>

<mosaic_0001>
module attributes {stable_mosaic.version = 11 : i64} {
  func.func @_ce_kernel(%arg0: i32, %arg1: i32, %arg2: memref<16x128xf32, #tpu.memory_space<vmem>>, %arg3: memref<16x1xi32, #tpu.memory_space<vmem>>, %arg4: memref<16x1xf32, #tpu.memory_space<vmem>>, %arg5: memref<16x1xf32, #tpu.memory_space<vmem>>, %arg6: memref<16x1xf32, #tpu.memory_space<vmem>>, %arg7: memref<16x1xf32, #tpu.memory_space<vmem>>) attributes {dimension_semantics = [#tpu.dimension_semantics<parallel>, #tpu.dimension_semantics<arbitrary>], iteration_bounds = array<i64: 2, 1>, scalar_prefetch = 0 : i64, scratch_operands = 3 : i64, tpu.core_type = #tpu.core_type<tc>, window_params = [{transform_indices = @transform_0, window_bounds = array<i64: 16, 128>}, {transform_indices = @transform_1, window_bounds = array<i64: 16, 1>}, {transform_indices = @transform_2, window_bounds = array<i64: 16, 1>}]} {
    %c0_i32 = arith.constant 0 : i32
    %0 = arith.cmpi eq, %arg1, %c0_i32 : i32
    %1 = arith.extui %0 : i1 to i32
    %c0_i32_0 = arith.constant 0 : i32
    %2 = arith.cmpi ne, %1, %c0_i32_0 : i32
    scf.if %2 {
      %cst_23 = arith.constant 0xFF800000 : f32
      %38 = vector.broadcast %cst_23 : f32 to vector<16x1xf32>
      %c0_24 = arith.constant 0 : index
      %c0_25 = arith.constant 0 : index
      %39 = vector.load %arg5[%c0_24, %c0_25] : memref<16x1xf32, #tpu.memory_space<vmem>>, vector<16x1xf32>
      tpu.vector_store %arg5[%c0_24, %c0_25], %38 {strides = array<i32>} : memref<16x1xf32, #tpu.memory_space<vmem>>, vector<16x1xf32>,
      %cst_26 = arith.constant 0.000000e+00 : f32
      %40 = vector.broadcast %cst_26 : f32 to vector<16x1xf32>
      %c0_27 = arith.constant 0 : index
      %c0_28 = arith.constant 0 : index
      %41 = vector.load %arg6[%c0_27, %c0_28] : memref<16x1xf32, #tpu.memory_space<vmem>>, vector<16x1xf32>
      tpu.vector_store %arg6[%c0_27, %c0_28], %40 {strides = array<i32>} : memref<16x1xf32, #tpu.memory_space<vmem>>, vector<16x1xf32>,
      %cst_29 = arith.constant 0.000000e+00 : f32
      %42 = vector.broadcast %cst_29 : f32 to vector<16x1xf32>
      %c0_30 = arith.constant 0 : index
      %c0_31 = arith.constant 0 : index
      %43 = vector.load %arg7[%c0_30, %c0_31] : memref<16x1xf32, #tpu.memory_space<vmem>>, vector<16x1xf32>
      tpu.vector_store %arg7[%c0_30, %c0_31], %42 {strides = array<i32>} : memref<16x1xf32, #tpu.memory_space<vmem>>, vector<16x1xf32>,
    } else {
    }
    %c0 = arith.constant 0 : index
    %c0_1 = arith.constant 0 : index
    %3 = vector.load %arg3[%c0, %c0_1] : memref<16x1xi32, #tpu.memory_space<vmem>>, vector<16x1xi32>
    %4 = tpu.iota {dimensions = array<i32: 1>} : vector<16x128xi32>
    %c128_i32 = arith.constant 128 : i32
    %5 = arith.muli %arg1, %c128_i32 : i32
    %6 = vector.broadcast %5 : i32 to vector<16x1xi32>
    %7 = arith.subi %3, %6 : vector<16x1xi32>
    %c0_2 = arith.constant 0 : index
    %c0_3 = arith.constant 0 : index
    %8 = vector.load %arg2[%c0_2, %c0_3] : memref<16x128xf32, #tpu.memory_space<vmem>>, vector<16x128xf32>
    %c0_4 = arith.constant 0 : index
    %c0_5 = arith.constant 0 : index
    %9 = vector.load %arg7[%c0_4, %c0_5] : memref<16x1xf32, #tpu.memory_space<vmem>>, vector<16x1xf32>
    %10 = vector.broadcast %7 : vector<16x1xi32> to vector<16x128xi32>
    %11 = arith.cmpi eq, %4, %10 : vector<16x128xi32>
    %cst = arith.constant 0.000000e+00 : f32
    %12 = vector.broadcast %cst : f32 to vector<16x128xf32>
    %13 = arith.select %11, %8, %12 : vector<16x128xi1>, vector<16x128xf32>
    %cst_6 = arith.constant dense<0.000000e+00> : vector<16xf32>
    %14 = vector.multi_reduction <add>, %13, %cst_6 [1] : vector<16x128xf32> to vector<16xf32>
    %15 = vector.shape_cast %14 : vector<16xf32> to vector<16x1xf32>
    %16 = arith.addf %9, %15 : vector<16x1xf32>
    %c0_7 = arith.constant 0 : index
    %c0_8 = arith.constant 0 : index
    %17 = vector.load %arg7[%c0_7, %c0_8] : memref<16x1xf32, #tpu.memory_space<vmem>>, vector<16x1xf32>
    tpu.vector_store %arg7[%c0_7, %c0_8], %16 {strides = array<i32>} : memref<16x1xf32, #tpu.memory_space<vmem>>, vector<16x1xf32>,
    %c0_9 = arith.constant 0 : index
    %c0_10 = arith.constant 0 : index
    %18 = vector.load %arg5[%c0_9, %c0_10] : memref<16x1xf32, #tpu.memory_space<vmem>>, vector<16x1xf32>
    %cst_11 = arith.constant dense<0xFF800000> : vector<16xf32>
    %19 = vector.multi_reduction <maximumf>, %8, %cst_11 [1] : vector<16x128xf32> to vector<16xf32>
    %20 = vector.shape_cast %19 : vector<16xf32> to vector<16x1xf32>
    %21 = arith.maximumf %18, %20 : vector<16x1xf32>
    %c0_12 = arith.constant 0 : index
    %c0_13 = arith.constant 0 : index
    %22 = vector.load %arg5[%c0_12, %c0_13] : memref<16x1xf32, #tpu.memory_space<vmem>>, vector<16x1xf32>
    %23 = arith.subf %22, %21 : vector<16x1xf32>
    %24 = math.exp %23 : vector<16x1xf32>
    %c0_14 = arith.constant 0 : index
    %c0_15 = arith.constant 0 : index
    %25 = vector.load %arg6[%c0_14, %c0_15] : memref<16x1xf32, #tpu.memory_space<vmem>>, vector<16x1xf32>
    %26 = arith.mulf %24, %25 : vector<16x1xf32>
    %27 = vector.broadcast %21 : vector<16x1xf32> to vector<16x128xf32>
    %28 = arith.subf %8, %27 : vector<16x128xf32>
    %29 = math.exp %28 : vector<16x128xf32>
    %cst_16 = arith.constant dense<0.000000e+00> : vector<16xf32>
    %30 = vector.multi_reduction <add>, %29, %cst_16 [1] : vector<16x128xf32> to vector<16xf32>
    %31 = vector.shape_cast %30 : vector<16xf32> to vector<16x1xf32>
    %32 = arith.addf %26, %31 : vector<16x1xf32>
    %c0_17 = arith.constant 0 : index
    %c0_18 = arith.constant 0 : index
    %33 = vector.load %arg6[%c0_17, %c0_18] : memref<16x1xf32, #tpu.memory_space<vmem>>, vector<16x1xf32>
    tpu.vector_store %arg6[%c0_17, %c0_18], %32 {strides = array<i32>} : memref<16x1xf32, #tpu.memory_space<vmem>>, vector<16x1xf32>,
    %c0_19 = arith.constant 0 : index
    %c0_20 = arith.constant 0 : index
    %34 = vector.load %arg5[%c0_19, %c0_20] : memref<16x1xf32, #tpu.memory_space<vmem>>, vector<16x1xf32>
    tpu.vector_store %arg5[%c0_19, %c0_20], %21 {strides = array<i32>} : memref<16x1xf32, #tpu.memory_space<vmem>>, vector<16x1xf32>,
    %c0_i32_21 = arith.constant 0 : i32
    %35 = arith.cmpi eq, %arg1, %c0_i32_21 : i32
    %36 = arith.extui %35 : i1 to i32
    %c0_i32_22 = arith.constant 0 : i32
    %37 = arith.cmpi ne, %36, %c0_i32_22 : i32
    scf.if %37 {
      %c0_23 = arith.constant 0 : index
      %c0_24 = arith.constant 0 : index
      %38 = vector.load %arg5[%c0_23, %c0_24] : memref<16x1xf32, #tpu.memory_space<vmem>>, vector<16x1xf32>
      %c0_25 = arith.constant 0 : index
      %c0_26 = arith.constant 0 : index
      %39 = vector.load %arg6[%c0_25, %c0_26] : memref<16x1xf32, #tpu.memory_space<vmem>>, vector<16x1xf32>
      %40 = math.log %39 : vector<16x1xf32>
      %41 = arith.addf %38, %40 : vector<16x1xf32>
      %c-100_i32 = arith.constant -100 : i32
      %42 = vector.broadcast %c-100_i32 : i32 to vector<16x1xi32>
      %43 = arith.cmpi ne, %3, %42 : vector<16x1xi32>
      %c0_27 = arith.constant 0 : index
      %c0_28 = arith.constant 0 : index
      %44 = vector.load %arg7[%c0_27, %c0_28] : memref<16x1xf32, #tpu.memory_space<vmem>>, vector<16x1xf32>
      %45 = arith.subf %41, %44 : vector<16x1xf32>
      %cst_29 = arith.constant 0.000000e+00 : f32
      %46 = vector.broadcast %cst_29 : f32 to vector<16x1xf32>
      %47 = arith.select %43, %45, %46 : vector<16x1xi1>, vector<16x1xf32>
      %c0_30 = arith.constant 0 : index
      %c0_31 = arith.constant 0 : index
      %48 = vector.load %arg4[%c0_30, %c0_31] : memref<16x1xf32, #tpu.memory_space<vmem>>, vector<16x1xf32>
      tpu.vector_store %arg4[%c0_30, %c0_31], %47 {strides = array<i32>} : memref<16x1xf32, #tpu.memory_space<vmem>>, vector<16x1xf32>,
    } else {
    }
    return
  }
  func.func @transform_0(%arg0: i32, %arg1: i32) -> (i32, i32) {
    %c0_i32 = arith.constant 0 : i32
    return %arg0, %arg1 : i32, i32
  }
  func.func @transform_1(%arg0: i32, %arg1: i32) -> (i32, i32) {
    %c0_i32 = arith.constant 0 : i32
    %c0_i32_0 = arith.constant 0 : i32
    return %arg0, %c0_i32 : i32, i32
  }
  func.func @transform_2(%arg0: i32, %arg1: i32) -> (i32, i32) {
    %c0_i32 = arith.constant 0 : i32
    %c0_i32_0 = arith.constant 0 : i32
    return %arg0, %c0_i32 : i32, i32
  }
}

</mosaic_0001>

<llo_original>
// kernel: tpu_custom_call.1
$region0: #{tpu_custom_call.1}
  #allocation0 [shape = 'u32[]', space=smem, size = 0x4, offset = 0x4, fixed_abs, tag = 'smem constant byte address 0x4 - core index']
  #allocation1 [shape = 'u32[144,128]{1,0:T(1,128)}', space=vmem, size = 0x12000, scoped, tag = 'internal scratch']
  #allocation2 [shape = 'f32[16,1]{1,0:T(8,128)}', space=vmem, size = 0x2000, scoped, tag = 'scratch operand']
  #allocation3 [shape = 'f32[16,1]{1,0:T(8,128)}', space=vmem, size = 0x2000, scoped, tag = 'scratch operand']
  #allocation4 [shape = 'f32[16,1]{1,0:T(8,128)}', space=vmem, size = 0x2000, scoped, tag = 'scratch operand']
  %s0 = inlined_call_operand.vmem [shape: f32[18,128], index: 0, kind: input, shape index: {}]
  %s1 = inlined_call_operand.vmem [shape: s32[32,1], index: 1, kind: input, shape index: {}]
  %s2 = inlined_call_operand.vmem [shape: f32[32,1], index: 2, kind: output, shape index: {}]
  %s3 = sld [smem:[#allocation0]]
  $region49: #{tpu_custom_call.1} parent=0
    _
  %s5 = ssub.s32 1, %s3
  %s6 = scalar_select 0, %s5, %s3
  loop: start=0, step=1, limit=4
  $region2: #{tpu_custom_call.1} parent=0 // loop_pre_header
    _
  $region3: #{tpu_custom_call.1} parent=0 // loop_header
    %s8 = sphi 0, %s12
    %p9 = scmp.ge.s32.totalorder %s8, 4
    %s15 = sphi 0, %s27
    %s16 = sphi 0, %s23
    %s17 = sphi 0, %s15
    %s18 = sphi 0, %s16
    %s19 = sphi 0, %s17
    %s20 = sphi 0, %s18
    %s32 = sphi 0, %s34
    %s35 = sphi 0, %s32
    %s36 = sphi 0, %s35
    %s52 = sphi 0, %s36
    %s58 = sphi 0, %s60
    %s61 = sphi 0, %s58
    %s62 = sphi 0, %s61
    %s78 = sphi 0, %s62
    %s84 = sphi 0, %s86
    %s87 = sphi 0, %s84
    %s88 = sphi 0, %s87
    %s104 = sphi 0, %s88
  $region4: #{tpu_custom_call.1} parent=0 // loop_header_branch
    %11 = sbr.rel (%p9) target = $region8
  $region5: #{tpu_custom_call.1} parent=0 // loop_body
    %s13 = ssub.s32 %s8, 1
    %s14 = ssub.s32 %s8, 2
    %s21 = sadd.s32 1, %s16
    %p22 = scmp.ge.s32.totalorder %s21, 1
    %s23 = scalar_select %p22, 0, %s21
    %s24 = sadd.s32 1, %s15
    %s25 = scalar_select %p22, %s24, %s15
    %p26 = scmp.ge.s32.totalorder %s25, 2
    %s27 = scalar_select %p26, 0, %s25
    %s28 = ssub.s32 %s15, %s27
    %s29 = ssub.s32 %s16, %s23
    %s30 = sor.u32 %s28, %s29
    %p31 = scmp.eq.s32.totalorder %s30, 0
    %s33 = sadd.s32 %s32, 1
    %s34 = scalar_select %p31, %s32, %s33
    %p37 = pneg %p31
    %p38 = scmp.eq.s32.totalorder %s8, 1
    %p39 = por %p37, %p38
    %p40 = scmp.ne.s32.totalorder %s32, %s35
    %p41 = scmp.eq.s32.totalorder %s8, 0
    %p42 = por %p40, %p41
    %p43 = scmp.ne.s32.totalorder %s32, %s35
    %p44 = scmp.eq.s32.totalorder %s13, 1
    %p45 = por %p43, %p44
    %p46 = scmp.ne.s32.totalorder %s35, %s36
    %p47 = scmp.eq.s32.totalorder %s13, 0
    %p48 = por %p46, %p47
    %p49 = scmp.ne.s32.totalorder %s35, %s36
    %p50 = scmp.eq.s32.totalorder %s14, 1
    %p51 = por %p49, %p50
    %p53 = scmp.ne.s32.totalorder %s36, %s52
    %p54 = scmp.eq.s32.totalorder %s14, 0
    %p55 = por %p53, %p54
    %s56 = ssub.s32 %s15, %s27
    %p57 = scmp.eq.s32.totalorder %s56, 0
    %s59 = sadd.s32 %s58, 1
    %s60 = scalar_select %p57, %s58, %s59
    %p63 = pneg %p57
    %p64 = scmp.eq.s32.totalorder %s8, 1
    %p65 = por %p63, %p64
    %p66 = scmp.ne.s32.totalorder %s58, %s61
    %p67 = scmp.eq.s32.totalorder %s8, 0
    %p68 = por %p66, %p67
    %p69 = scmp.ne.s32.totalorder %s58, %s61
    %p70 = scmp.eq.s32.totalorder %s13, 1
    %p71 = por %p69, %p70
    %p72 = scmp.ne.s32.totalorder %s61, %s62
    %p73 = scmp.eq.s32.totalorder %s13, 0
    %p74 = por %p72, %p73
    %p75 = scmp.ne.s32.totalorder %s61, %s62
    %p76 = scmp.eq.s32.totalorder %s14, 1
    %p77 = por %p75, %p76
    %p79 = scmp.ne.s32.totalorder %s62, %s78
    %p80 = scmp.eq.s32.totalorder %s14, 0
    %p81 = por %p79, %p80
    %s82 = ssub.s32 %s15, %s27
    %p83 = scmp.eq.s32.totalorder %s82, 0
    %s85 = sadd.s32 %s84, 1
    %s86 = scalar_select %p83, %s84, %s85
    %p89 = pneg %p83
    %p90 = scmp.eq.s32.totalorder %s8, 1
    %p91 = por %p89, %p90
    %p92 = scmp.ne.s32.totalorder %s84, %s87
    %p93 = scmp.eq.s32.totalorder %s8, 0
    %p94 = por %p92, %p93
    %p95 = scmp.ne.s32.totalorder %s84, %s87
    %p96 = scmp.eq.s32.totalorder %s13, 1
    %p97 = por %p95, %p96
    %p98 = scmp.ne.s32.totalorder %s87, %s88
    %p99 = scmp.eq.s32.totalorder %s13, 0
    %p100 = por %p98, %p99
    %p101 = scmp.ne.s32.totalorder %s87, %s88
    %p102 = scmp.eq.s32.totalorder %s14, 1
    %p103 = por %p101, %p102
    %p105 = scmp.ne.s32.totalorder %s88, %s104
    %p106 = scmp.eq.s32.totalorder %s14, 0
    %p107 = por %p105, %p106
    %p108 = scmp.le.s32.totalorder 1, %s8
    %p109 = scmp.lt.s32.totalorder %s8, 3
    %p110 = pnand %p108, %p109
    %p111 = pneg %p110
    // Predicated region
    $region9: #{tpu_custom_call.1} parent=5 // pred_check
      _
    $region10: #{tpu_custom_call.1} parent=5 // pred_check_branch
      %113 = sbr.rel (%p110) target = $region12
    $region11: #{tpu_custom_call.1} parent=5 // pred_region
      %s114 = ssub.s32 %s8, 1
    $region12: #{tpu_custom_call.1} parent=5 // pred_fallthru
      _
    %p115 = scmp.lt.s32.totalorder %s8, 2
    // Predicated region
    $region13: #{tpu_custom_call.1} parent=5 // pred_check
      %p116 = pneg %p115
    $region14: #{tpu_custom_call.1} parent=5 // pred_check_branch
      %118 = sbr.rel (%p116) target = $region16
    $region15: #{tpu_custom_call.1} parent=5 // pred_region
      // Predicated region
      $region17: #{tpu_custom_call.1} parent=15 // pred_check
        %p119 = pneg %p42
      $region18: #{tpu_custom_call.1} parent=15 // pred_check_branch
        %121 = sbr.rel (%p119) target = $region20
      $region19: #{tpu_custom_call.1} parent=15 // pred_region
        %s122 = smul.u32 2, %s15
        %s123 = ssub.s32 3, %s122
        %p124 = scmp.lt.s32.totalorder %s123, 2
        %s125 = scalar_select %p124, %s123, 2
        %s126 = smul.u32 128, %s125
        %p127 = scmp.lt.s32.totalorder %s122, 2
        %s128 = scalar_select %p127, %s122, 2
        %p129 = scmp.lt.s32.totalorder %s16, 0
        %s130 = scalar_select %p129, %s16, 0
        %s131 = sadd.s32 %s130, %s128
        %s132 = smul.addr %s131, 8
        %s133 = scalar_lea.vmem %s0, %s132
        %s134 = smul.u32 2, %s15
        %s135 = ssub.s32 3, %s134
        %p136 = scmp.lt.s32.totalorder %s135, 2
        %s137 = scalar_select %p136, %s135, 2
        %s138 = smul.u32 128, %s137
      $region20: #{tpu_custom_call.1} parent=15 // pred_fallthru
        _
      // Predicated region
      $region21: #{tpu_custom_call.1} parent=15 // pred_check
        %p139 = pneg %p68
      $region22: #{tpu_custom_call.1} parent=15 // pred_check_branch
        %141 = sbr.rel (%p139) target = $region24
      $region23: #{tpu_custom_call.1} parent=15 // pred_region
        %s142 = smul.u32 2, %s15
        %p143 = scmp.lt.s32.totalorder %s142, 3
        %s144 = scalar_select %p143, %s142, 3
        %s145 = smul.addr %s144, 8
        %s146 = scalar_lea.vmem %s1, %s145
        %s147 = smul.u32 2, %s15
      $region24: #{tpu_custom_call.1} parent=15 // pred_fallthru
        _
    $region16: #{tpu_custom_call.1} parent=5 // pred_fallthru
      _
    %p148 = scmp.le.s32.totalorder 1, %s8
    %p149 = scmp.lt.s32.totalorder %s8, 3
    %p150 = pnand %p148, %p149
    %p151 = pneg %p150
    // Predicated region
    $region25: #{tpu_custom_call.1} parent=5 // pred_check
      _
    $region26: #{tpu_custom_call.1} parent=5 // pred_check_branch
      %153 = sbr.rel (%p150) target = $region28
    $region27: #{tpu_custom_call.1} parent=5 // pred_region
      %s154 = ssub.s32 %s8, 1
      %s155 = smul.u32 2, %s17
      %s156 = ssub.s32 3, %s155
      %p157 = scmp.lt.s32.totalorder %s156, 2
      %s158 = scalar_select %p157, %s156, 2
      %s159 = smul.u32 128, %s158
      %p160 = scmp.lt.s32.totalorder %s155, 2
      %s161 = scalar_select %p160, %s155, 2
      %p162 = scmp.lt.s32.totalorder %s18, 0
      %s163 = scalar_select %p162, %s18, 0
      %s164 = sadd.s32 %s163, %s161
      %s165 = smul.addr %s164, 8
      %s166 = scalar_lea.vmem %s0, %s165
      %p167 = pneg %p48
      %p168 = pneg %p45
      %s169 = smul.u32 2, %s17
      %p170 = scmp.lt.s32.totalorder %s169, 3
      %s171 = scalar_select %p170, %s169, 3
      %s172 = smul.addr %s171, 8
      %s173 = scalar_lea.vmem %s1, %s172
      %p174 = pneg %p74
      %p175 = pneg %p71
      %p176 = pneg %p100
      %p177 = pneg %p97
      %s178 = smul.u32 2, %s17
      %p179 = scmp.lt.s32.totalorder %s178, 3
      %s180 = scalar_select %p179, %s178, 3
      %s181 = smul.addr %s180, 8
      %s182 = scalar_lea.vmem %s2, %s181
      %s183 = smul.u32 2, %s17
      %s184 = ssub.s32 3, %s183
      %p185 = scmp.lt.s32.totalorder %s184, 2
      %s186 = scalar_select %p185, %s184, 2
      %s187 = smul.u32 128, %s186
      %p188 = scmp.lt.s32.totalorder %s183, 2
      %s189 = scalar_select %p188, %s183, 2
      %p190 = scmp.lt.s32.totalorder %s18, 0
      %s191 = scalar_select %p190, %s18, 0
      %s192 = sadd.s32 %s191, %s189
      %s193 = smul.addr %s192, 8
      %s194 = scalar_lea.vmem %s0, %s193
      %s195 = smul.u32 2, %s17
      %s196 = ssub.s32 3, %s195
      %p197 = scmp.lt.s32.totalorder %s196, 2
      %s198 = scalar_select %p197, %s196, 2
      %s199 = smul.u32 128, %s198
      %s200 = smul.u32 2, %s17
      %p201 = scmp.lt.s32.totalorder %s200, 3
      %s202 = scalar_select %p201, %s200, 3
      %s203 = smul.addr %s202, 8
      %s204 = scalar_lea.vmem %s1, %s203
      %s205 = smul.u32 2, %s17
      %s206 = smul.u32 2, %s17
      %p207 = scmp.lt.s32.totalorder %s206, 3
      %s208 = scalar_select %p207, %s206, 3
      %s209 = smul.addr %s208, 8
      %s210 = scalar_lea.vmem %s2, %s209
      %s211 = smul.u32 2, %s17
      %p212 = scmp.eq.s32.totalorder %s18, 0
      // Predicated region
      $region29: #{tpu_custom_call.1} parent=27 // pred_check
        %p213 = pneg %p212
      $region30: #{tpu_custom_call.1} parent=27 // pred_check_branch
        %215 = sbr.rel (%p213) target = $region32
      $region31: #{tpu_custom_call.1} parent=27 // pred_region
        %vm216 = vcmask 7168
        %217 = vst.msk [vmem:[#allocation2] sm:$0xff] %vm216, -inf
        %218 = vst.msk [vmem:[#allocation2 + $0x8] sm:$0xff] %vm216, -inf
        %219 = vst.msk [vmem:[#allocation3] sm:$0xff] %vm216, 0.0
        %220 = vst.msk [vmem:[#allocation3 + $0x8] sm:$0xff] %vm216, 0.0
        %221 = vst.msk [vmem:[#allocation4] sm:$0xff] %vm216, 0.0
        %222 = vst.msk [vmem:[#allocation4 + $0x8] sm:$0xff] %vm216, 0.0
      $region32: #{tpu_custom_call.1} parent=27 // pred_fallthru
        _
      %v223 = vld [vmem:[%s204] sm:$0xff]
      %v224 = vld [vmem:[%s204 + $0x8] sm:$0xff]
      %v225 = vlaneseq
      %v226 = vand.u32 %v225, 127
      %s227 = smul.u32 %s18, 128
      %v228 = vstv %s227
      %v229 = vsub.s32 %v223, %v228
      %v230 = vsub.s32 %v224, %v228
      %v231 = vld [vmem:[%s194] sm:$0xff]
      %v232 = vld [vmem:[%s194 + $0x8] sm:$0xff]
      %v233 = vld [vmem:[#allocation4] sm:$0xff]
      %v234 = vld [vmem:[#allocation4 + $0x8] sm:$0xff]
      %235 = vset.pattern.permute.xlu0 0
      %236 = vperm.xlu0 %235, %v229
      %v237 = vpop.permute.xlu0 %236
      %238 = vset.pattern.permute.xlu0 0
      %239 = vperm.xlu0 %238, %v230
      %v240 = vpop.permute.xlu0 %239
      %vm241 = vcmp.eq.s32.totalorder %v226, %v237
      %vm242 = vcmp.eq.s32.totalorder %v226, %v240
      %v243 = vsel %vm241, %v231, 0.0
      %v244 = vsel %vm242, %v232, 0.0
      %245 = vadd.xlane.f32.xlu0 %v243
      %v246 = vpop.xlane.xlu0 %245
      %247 = vadd.xlane.f32.xlu0 %v244
      %v248 = vpop.xlane.xlu0 %247
      %v249 = vadd.f32 %v233, %v246
      %v250 = vadd.f32 %v234, %v248
      %vm251 = vcmask 7168
      %252 = vst.msk [vmem:[#allocation4] sm:$0xff] %vm251, %v249
      %253 = vst.msk [vmem:[#allocation4 + $0x8] sm:$0xff] %vm251, %v250
      %v254 = vld [vmem:[#allocation2] sm:$0xff]
      %v255 = vld [vmem:[#allocation2 + $0x8] sm:$0xff]
      %256 = vmax.xlane.f32.xlu0 %v231
      %v257 = vpop.xlane.xlu0 %256
      %258 = vmax.xlane.f32.xlu0 %v232
      %v259 = vpop.xlane.xlu0 %258
      %v260 = vmax.f32 %v254, %v257
      %v261 = vmax.f32 %v255, %v259
      %v262 = vsub.f32 %v254, %v260
      %v263 = vsub.f32 %v255, %v261
      %v264 = vmul.f32 %v262, 1.442695
      %v265 = vpow.pop %v264
      %v266 = vmul.f32 %v263, 1.442695
      %v267 = vpow.pop %v266
      %v268 = vld [vmem:[#allocation3] sm:$0xff]
      %v269 = vld [vmem:[#allocation3 + $0x8] sm:$0xff]
      %v270 = vmul.f32 %v265, %v268
      %v271 = vmul.f32 %v267, %v269
      %273 = vset.pattern.permute.xlu0 0
      %274 = vperm.xlu0 %273, %v260
      %v275 = vpop.permute.xlu0 %274
      %278 = vset.pattern.permute.xlu0 0
      %279 = vperm.xlu0 %278, %v261
      %v280 = vpop.permute.xlu0 %279
      %v282 = vsub.f32 %v231, %v275
      %v283 = vsub.f32 %v232, %v280
      %v284 = vmul.f32 %v282, 1.442695
      %v285 = vpow.pop %v284
      %v286 = vmul.f32 %v283, 1.442695
      %v287 = vpow.pop %v286
      %288 = vadd.xlane.f32.xlu0 %v285
      %v289 = vpop.xlane.xlu0 %288
      %290 = vadd.xlane.f32.xlu0 %v287
      %v291 = vpop.xlane.xlu0 %290
      %v292 = vadd.f32 %v270, %v289
      %v293 = vadd.f32 %v271, %v291
      %294 = vst.msk [vmem:[#allocation3] sm:$0xff] %vm251, %v292
      %295 = vst.msk [vmem:[#allocation3 + $0x8] sm:$0xff] %vm251, %v293
      %296 = vst.msk [vmem:[#allocation2] sm:$0xff] %vm251, %v260
      %297 = vst.msk [vmem:[#allocation2 + $0x8] sm:$0xff] %vm251, %v261
      // Predicated region
      $region33: #{tpu_custom_call.1} parent=27 // pred_check
        %p298 = pneg %p212
      $region34: #{tpu_custom_call.1} parent=27 // pred_check_branch
        %300 = sbr.rel (%p298) target = $region36
      $region35: #{tpu_custom_call.1} parent=27 // pred_region
        %v301 = vld [vmem:[#allocation2] sm:$0xff]
        %v302 = vld [vmem:[#allocation2 + $0x8] sm:$0xff]
        %v303 = vld [vmem:[#allocation3] sm:$0xff]
        %v304 = vld [vmem:[#allocation3 + $0x8] sm:$0xff]
        %v305 = vlog2.pop %v303
        %v306 = vmul.f32 %v305, 0.6931472
        %v307 = vlog2.pop %v304
        %v308 = vmul.f32 %v307, 0.6931472
        %v309 = vadd.f32 %v301, %v306
        %v310 = vadd.f32 %v302, %v308
        %vm311 = vcmp.ne.s32.totalorder %v223, 4294967196
        %vm312 = vcmp.ne.s32.totalorder %v224, 4294967196
        %v313 = vld [vmem:[#allocation4] sm:$0xff]
        %v314 = vld [vmem:[#allocation4 + $0x8] sm:$0xff]
        %v315 = vsub.f32 %v309, %v313
        %v316 = vsub.f32 %v310, %v314
        %v317 = vsel %vm311, %v315, 0.0
        %v318 = vsel %vm312, %v316, 0.0
        %319 = vst.msk [vmem:[%s210] sm:$0xff] %vm251, %v317
        %320 = vst.msk [vmem:[%s210 + $0x8] sm:$0xff] %vm251, %v318
      $region36: #{tpu_custom_call.1} parent=27 // pred_fallthru
        _
      %s321 = smul.u32 2, %s17
      %p322 = scmp.lt.s32.totalorder %s321, 3
      %s323 = scalar_select %p322, %s321, 3
      %s324 = smul.addr %s323, 8
      %s325 = scalar_lea.vmem %s2, %s324
      // Predicated region
      $region37: #{tpu_custom_call.1} parent=27 // pred_check
        %p326 = pneg %p97
      $region38: #{tpu_custom_call.1} parent=27 // pred_check_branch
        %328 = sbr.rel (%p326) target = $region40
      $region39: #{tpu_custom_call.1} parent=27 // pred_region
        %s329 = smul.u32 2, %s17
      $region40: #{tpu_custom_call.1} parent=27 // pred_fallthru
        _
    $region28: #{tpu_custom_call.1} parent=5 // pred_fallthru
      _
    %p330 = scmp.le.s32.totalorder 2, %s8
    // Predicated region
    $region41: #{tpu_custom_call.1} parent=5 // pred_check
      %p331 = pneg %p330
    $region42: #{tpu_custom_call.1} parent=5 // pred_check_branch
      %333 = sbr.rel (%p331) target = $region44
    $region43: #{tpu_custom_call.1} parent=5 // pred_region
      %s334 = ssub.s32 %s8, 2
      // Predicated region
      $region45: #{tpu_custom_call.1} parent=43 // pred_check
        %p335 = pneg %p103
      $region46: #{tpu_custom_call.1} parent=43 // pred_check_branch
        %337 = sbr.rel (%p335) target = $region48
      $region47: #{tpu_custom_call.1} parent=43 // pred_region
        %s338 = smul.u32 2, %s19
        %p339 = scmp.lt.s32.totalorder %s338, 3
        %s340 = scalar_select %p339, %s338, 3
        %s341 = smul.addr %s340, 8
        %s342 = scalar_lea.vmem %s2, %s341
      $region48: #{tpu_custom_call.1} parent=43 // pred_fallthru
        _
    $region44: #{tpu_custom_call.1} parent=5 // pred_fallthru
      _
  $region6: #{tpu_custom_call.1} parent=0 // loop_footer
    %s12 = sadd.s32 1, %s8
  $region7: #{tpu_custom_call.1} parent=0 // loop_footer_branch
    %7 = sbr.rel target = $region3
  $region8: #{tpu_custom_call.1} parent=0 // loop_exit
    _

</llo_original>
